<compile_context>
chip_gen: v5e
topology: v5e:2x2
jax: 0.10.0
libtpu: 0.0.40
codegen_flags: <defaults>
</compile_context>

<pallas_src>
import jax
import jax.numpy as jnp
from jax.experimental import pallas as pl
from jax.experimental.pallas import tpu as pltpu


def _planar_1d_kernel(params_ref, obs_ref, x_ref, x_out_ref, ld_out_ref):
    # params_ref: SMEM (3,) -> [u, w, b] (f32 scalars)
    u = params_ref[0]
    w = params_ref[1]
    b = params_ref[2]
    uw = u * w                              # hoisted scalar product

    x = x_ref[...]                          # (TB, TP)
    obs = obs_ref[...]                      # (TB, 1)

    # Materialize the lane broadcast once and reuse it (no CSE of broadcast_in_dim).
    shifted = jnp.broadcast_to(b * obs, x.shape)          # (TB, TP)

    # x' = x + u * tanh(w * x + b * obs_t)
    x_new = x + u * jnp.tanh(w * x + shifted)

    # NOTE: the PyTorch module reassigns proposal_samples BEFORE computing log_det,
    # so the second tanh is evaluated on the *updated* samples. Reproduced exactly.
    t = jnp.tanh(w * x_new + shifted)
    ld = jnp.log(jnp.abs(1.0 + uw * (1.0 - t * t)))       # may be -inf, as in torch

    x_out_ref[...] = x_new.astype(x_out_ref.dtype)
    ld_out_ref[...] = ld.astype(ld_out_ref.dtype)


def _vmem_capacity_bytes():
    try:
        info = pltpu.get_tpu_info()
        cap = getattr(info, "vmem_capacity_bytes", None)
        if cap:
            return int(cap)
    except Exception:
        pass
    return 128 << 20   # conservative v5e/v6e default


def _select_tiles(B, P, itemsize, vmem_capacity):
    """Pick (TB, TP, vmem_limit). 3 tiled (TB,TP) arrays (x, x_new, log_det),
    double-buffered -> 6 live blocks; budget per block is chip-aware."""
    if vmem_capacity <= (64 << 20):       # v7x-class: 64 MiB physical VMEM
        block_budget = 2 << 20            # ~12 MiB live in double-buffered blocks
    else:                                 # v5e / v6e: 128 MiB physical VMEM
        block_budget = 4 << 20            # ~24 MiB live

    row_bytes = P * itemsize
    if row_bytes <= block_budget:
        # Full-row tiles: each block is one contiguous HBM stretch. Tile over batch.
        TP = P
        tb_cap = max(8, (block_budget // row_bytes) // 8 * 8)
        TB = B if B <= tb_cap else tb_cap
        if TB == B and B >= 16:
            # Keep >= 2 grid cells along a parallel axis so 2-TC chips can shard.
            TB = max(8, ((B // 2) + 7) // 8 * 8)
    else:
        # Very large P: lane-dense split of the particle axis.
        TB = B if B <= 256 else 256
        TP = max(128, (block_budget // (max(TB, 8) * itemsize)) // 128 * 128)
        TP = min(TP, P)

    block_bytes = TB * TP * itemsize
    limit_ceiling = min(96 << 20, (vmem_capacity * 3) // 4)   # ~48 MiB on v7x, 96 MiB else
    vmem_limit = max(32 << 20, 6 * block_bytes + (16 << 20))
    vmem_limit = int(min(vmem_limit, limit_ceiling))
    return TB, TP, vmem_limit


def planar_1d_forward(proposal_samples, observations, time, u, w, b):
    """proposal_samples: (B, P); observations: (T, B); time: int (traced OK).
    Returns (new_proposal_samples, log_det), both (B, P)."""
    B, P = proposal_samples.shape
    itemsize = jnp.dtype(proposal_samples.dtype).itemsize

    # observations[time].view(-1, 1) — traced-friendly (no recompile per timestep).
    obs_t = jax.lax.dynamic_slice_in_dim(observations, time, 1, axis=0)
    obs_t = obs_t.reshape(B, 1).astype(jnp.float32)

    params = jnp.stack([jnp.asarray(u), jnp.asarray(w), jnp.asarray(b)]
                       ).astype(jnp.float32)               # (3,) scalars -> SMEM

    TB, TP, vmem_limit = _select_tiles(B, P, itemsize, _vmem_capacity_bytes())
    grid = (pl.cdiv(B, TB), pl.cdiv(P, TP))

    x_new, log_det = pl.pallas_call(
        _planar_1d_kernel,
        grid=grid,
        out_shape=(
            jax.ShapeDtypeStruct((B, P), proposal_samples.dtype),
            jax.ShapeDtypeStruct((B, P), proposal_samples.dtype),
        ),
        in_specs=[
            pl.BlockSpec(memory_space=pltpu.SMEM),           # params (u, w, b)
            pl.BlockSpec((TB, 1), lambda i, j: (i, 0)),      # obs column (per batch tile)
            pl.BlockSpec((TB, TP), lambda i, j: (i, j)),     # proposal samples
        ],
        out_specs=(
            pl.BlockSpec((TB, TP), lambda i, j: (i, j)),     # updated samples
            pl.BlockSpec((TB, TP), lambda i, j: (i, j)),     # log_det
        ),
        # In-place update of the samples buffer (matches PyTorch reassignment).
        # Callers must not reuse the original samples array after this call.
        input_output_aliases={2: 0},
        compiler_params=pltpu.CompilerParams(
            dimension_semantics=("parallel", "parallel"),
            vmem_limit_bytes=vmem_limit,
        ),
    )(params, obs_t, proposal_samples)

    # TODO(synk): fusing the time loop (keep x VMEM-resident across T flow steps) and/or
    # reducing log_det over particles in-kernel would remove most HBM traffic, but both
    # change the module's one-call-per-timestep API, so they are left to the caller.
    return x_new, log_det


def _reference(proposal_samples, observations, time, u, w, b):
    obs_t = observations[time].reshape(-1, 1)
    x_new = proposal_samples + u * jnp.tanh(w * proposal_samples + b * obs_t)
    t = jnp.tanh(w * x_new + b * obs_t)
    ld = jnp.log(jnp.abs(1.0 + u * w * (1.0 - t ** 2)))
    return x_new, ld


if __name__ == "__main__":
    key = jax.random.PRNGKey(0)
    k_x, k_obs, k_u, k_w, k_b, k_x2, k_obs2 = jax.random.split(key, 7)

    # Parameters: module init draws each scalar from U(0, 0.25).
    u = jax.random.uniform(k_u, (), minval=0.0, maxval=0.25, dtype=jnp.float32)
    w = jax.random.uniform(k_w, (), minval=0.0, maxval=0.25, dtype=jnp.float32)
    b = jax.random.uniform(k_b, (), minval=0.0, maxval=0.25, dtype=jnp.float32)

    fwd = jax.jit(planar_1d_forward)

    # --- Test 1: small, single-tile grid -------------------------------------
    B, P, T = 8, 128, 8
    proposal_samples = jax.random.normal(k_x, (B, P), dtype=jnp.float32)
    observations = jax.random.normal(k_obs, (T, B), dtype=jnp.float32)

    time = jnp.int32(3)
    x_new, log_det = fwd(proposal_samples, observations, time, u, w, b)
    jax.block_until_ready((x_new, log_det))

    x_ref, ld_ref = _reference(proposal_samples, observations, 3, u, w, b)
    assert jnp.allclose(x_new, x_ref, atol=1e-5), "proposal_samples mismatch (test 1)"
    assert jnp.allclose(log_det, ld_ref, atol=1e-5), "log_det mismatch (test 1)"

    # --- Test 2: larger shape exercising the batch-tiled (multi-cell) grid ---
    B2, P2, T2 = 64, 512, 4
    proposal_samples2 = jax.random.normal(k_x2, (B2, P2), dtype=jnp.float32)
    observations2 = jax.random.normal(k_obs2, (T2, B2), dtype=jnp.float32)

    x_new2, log_det2 = fwd(proposal_samples2, observations2, jnp.int32(1), u, w, b)
    jax.block_until_ready((x_new2, log_det2))

    x_ref2, ld_ref2 = _reference(proposal_samples2, observations2, 1, u, w, b)
    assert jnp.allclose(x_new2, x_ref2, atol=1e-5), "proposal_samples mismatch (test 2)"
    assert jnp.allclose(log_det2, ld_ref2, atol=1e-5), "log_det mismatch (test 2)"

    print("KERNEL_OK")
</pallas_src>

<mosaic_0001>
module attributes {stable_mosaic.version = 11 : i64} {
  func.func @_planar_1d_kernel(%arg0: i32, %arg1: i32, %arg2: memref<3xf32, #tpu.memory_space<smem>>, %arg3: memref<8x1xf32, #tpu.memory_space<vmem>>, %arg4: memref<8x128xf32, #tpu.memory_space<vmem>>, %arg5: memref<8x128xf32, #tpu.memory_space<vmem>>, %arg6: memref<8x128xf32, #tpu.memory_space<vmem>>) attributes {dimension_semantics = [#tpu.dimension_semantics<parallel>, #tpu.dimension_semantics<parallel>], iteration_bounds = array<i64: 1, 1>, scalar_prefetch = 0 : i64, scratch_operands = 0 : i64, tpu.core_type = #tpu.core_type<tc>, window_params = [{transform_indices = @transform_0, window_bounds = array<i64: 3>}, {transform_indices = @transform_1, window_bounds = array<i64: 8, 1>}, {transform_indices = @transform_2, window_bounds = array<i64: 8, 128>}, {transform_indices = @transform_3, window_bounds = array<i64: 8, 128>}, {transform_indices = @transform_4, window_bounds = array<i64: 8, 128>}]} {
    %c0 = arith.constant 0 : index
    %0 = memref.load %arg2[%c0] : memref<3xf32, #tpu.memory_space<smem>>
    %c1 = arith.constant 1 : index
    %1 = memref.load %arg2[%c1] : memref<3xf32, #tpu.memory_space<smem>>
    %c2 = arith.constant 2 : index
    %2 = memref.load %arg2[%c2] : memref<3xf32, #tpu.memory_space<smem>>
    %3 = arith.mulf %0, %1 : f32
    %c0_0 = arith.constant 0 : index
    %c0_1 = arith.constant 0 : index
    %4 = vector.load %arg4[%c0_0, %c0_1] : memref<8x128xf32, #tpu.memory_space<vmem>>, vector<8x128xf32>
    %c0_2 = arith.constant 0 : index
    %c0_3 = arith.constant 0 : index
    %5 = vector.load %arg3[%c0_2, %c0_3] : memref<8x1xf32, #tpu.memory_space<vmem>>, vector<8x1xf32>
    %6 = vector.broadcast %2 : f32 to vector<8x1xf32>
    %7 = arith.mulf %6, %5 : vector<8x1xf32>
    %8 = vector.shape_cast %7 : vector<8x1xf32> to vector<8x1xf32>
    %9 = vector.broadcast %8 : vector<8x1xf32> to vector<8x128xf32>
    %10 = vector.broadcast %1 : f32 to vector<8x128xf32>
    %11 = arith.mulf %10, %4 : vector<8x128xf32>
    %12 = arith.addf %11, %9 : vector<8x128xf32>
    %13 = math.tanh %12 : vector<8x128xf32>
    %14 = vector.broadcast %0 : f32 to vector<8x128xf32>
    %15 = arith.mulf %14, %13 : vector<8x128xf32>
    %16 = arith.addf %4, %15 : vector<8x128xf32>
    %17 = vector.broadcast %1 : f32 to vector<8x128xf32>
    %18 = arith.mulf %17, %16 : vector<8x128xf32>
    %19 = arith.addf %18, %9 : vector<8x128xf32>
    %20 = math.tanh %19 : vector<8x128xf32>
    %21 = arith.mulf %20, %20 : vector<8x128xf32>
    %cst = arith.constant 1.000000e+00 : f32
    %22 = vector.broadcast %cst : f32 to vector<8x128xf32>
    %23 = arith.subf %22, %21 : vector<8x128xf32>
    %24 = vector.broadcast %3 : f32 to vector<8x128xf32>
    %25 = arith.mulf %24, %23 : vector<8x128xf32>
    %cst_4 = arith.constant 1.000000e+00 : f32
    %26 = vector.broadcast %cst_4 : f32 to vector<8x128xf32>
    %27 = arith.addf %26, %25 : vector<8x128xf32>
    %28 = math.absf %27 : vector<8x128xf32>
    %29 = math.log %28 : vector<8x128xf32>
    %c0_5 = arith.constant 0 : index
    %c0_6 = arith.constant 0 : index
    %30 = vector.load %arg5[%c0_5, %c0_6] : memref<8x128xf32, #tpu.memory_space<vmem>>, vector<8x128xf32>
    tpu.vector_store %arg5[%c0_5, %c0_6], %16 {strides = array<i32>} : memref<8x128xf32, #tpu.memory_space<vmem>>, vector<8x128xf32>,
    %c0_7 = arith.constant 0 : index
    %c0_8 = arith.constant 0 : index
    %31 = vector.load %arg6[%c0_7, %c0_8] : memref<8x128xf32, #tpu.memory_space<vmem>>, vector<8x128xf32>
    tpu.vector_store %arg6[%c0_7, %c0_8], %29 {strides = array<i32>} : memref<8x128xf32, #tpu.memory_space<vmem>>, vector<8x128xf32>,
    return
  }
  func.func @transform_0(%arg0: i32, %arg1: i32) -> i32 {
    %c0_i32 = arith.constant 0 : i32
    %c0_i32_0 = arith.constant 0 : i32
    return %c0_i32 : i32
  }
  func.func @transform_1(%arg0: i32, %arg1: i32) -> (i32, i32) {
    %c0_i32 = arith.constant 0 : i32
    %c0_i32_0 = arith.constant 0 : i32
    return %arg0, %c0_i32 : i32, i32
  }
  func.func @transform_2(%arg0: i32, %arg1: i32) -> (i32, i32) {
    %c0_i32 = arith.constant 0 : i32
    return %arg0, %arg1 : i32, i32
  }
  func.func @transform_3(%arg0: i32, %arg1: i32) -> (i32, i32) {
    %c0_i32 = arith.constant 0 : i32
    return %arg0, %arg1 : i32, i32
  }
  func.func @transform_4(%arg0: i32, %arg1: i32) -> (i32, i32) {
    %c0_i32 = arith.constant 0 : i32
    return %arg0, %arg1 : i32, i32
  }
}

</mosaic_0001>

<llo_original>
// kernel: planar_1d_forward.1
$region0: #{planar_1d_forward.1}
  #allocation0 [shape = 'u32[]', space=smem, size = 0x4, offset = 0x4, fixed_abs, tag = 'smem constant byte address 0x4 - core index']
  #allocation1 [shape = 'u32[72,128]{1,0:T(1,128)}', space=vmem, size = 0x9000, scoped, tag = 'internal scratch']
  %s0 = inlined_call_operand.vmem [shape: f32[3], index: 0, kind: input, shape index: {}]
  %s1 = inlined_call_operand.vmem [shape: f32[8,1], index: 1, kind: input, shape index: {}]
  %s2 = inlined_call_operand.hbm [shape: f32[8,128], index: 2, kind: input, shape index: {}, may-alias: {2,3}]
  %s3 = inlined_call_operand.hbm [shape: f32[8,128], index: 3, kind: output, shape index: {0}, may-alias: {2,3}]
  %s4 = inlined_call_operand.hbm [shape: f32[8,128], index: 4, kind: output, shape index: {1}]
  %5 = xla_tuple %s3, %s4
  %s6 = sld [smem:[#allocation0]]
  $region38: #{planar_1d_forward.1} parent=0
    _
  %s8 = ssub.s32 1, %s6
  %s9 = scalar_select 0, %s8, %s6
  $region1: #{planar_1d_forward.1} parent=0
    #allocation2 [shape = 'u8[512]{0}', space=smem, size = 0x200, scoped, tag = 'input window, operand 0, single buffered']
    #allocation3 [shape = 's32[1]{0}', space=sflag, size = 0x4, scoped, tag = 'scoped memory for planar_1d_forward.1']
    #allocation4 [shape = 's32[1]{0}', space=sflag, size = 0x4, scoped, tag = 'scoped memory for planar_1d_forward.1']
    #allocation5 [shape = 's32[1]{0}', space=sflag, size = 0x4, scoped, tag = 'scoped memory for planar_1d_forward.1']
    #allocation6 [shape = 'u8[4096]{0}', space=vmem, size = 0x1000, scoped, tag = 'input window, operand 2, single buffered']
    #allocation7 [shape = 'u8[4096]{0}', space=vmem, size = 0x1000, scoped, tag = 'output window, operand 0, single buffered']
    #allocation8 [shape = 'u8[4096]{0}', space=vmem, size = 0x1000, scoped, tag = 'output window, operand 1, single buffered']
    #allocation9 [shape = 's32[1]{0}', space=sflag, size = 0x4, scoped, tag = 'scoped memory for planar_1d_forward.1']
    %10 = vsyncpa [#allocation5], 0
    %11 = vsyncpa [#allocation3], 0
    %12 = vsyncpa [#allocation4], 0
    %13 = vsyncpa [#allocation9], 0
    // Predicated region
    $region2: #{planar_1d_forward.1} parent=1 // pred_check
      _
    $region3: #{planar_1d_forward.1} parent=1 // pred_check_branch
      %15 = sbr.rel (0) target = $region5
    $region4: #{planar_1d_forward.1} parent=1 // pred_region
      %17 = vsyncadd [#allocation5], 0
      %s19 = sshll.u32 %s0, 4
      %s20 = int_to_ptr.vmem [resolvable:$true] %s19
      %22 = dma.vmem_to_smem %s20, 16, [#allocation2], [#allocation5]
    $region5: #{planar_1d_forward.1} parent=1 // pred_fallthru
      _
    // Predicated region
    $region6: #{planar_1d_forward.1} parent=1 // pred_check
      _
    $region7: #{planar_1d_forward.1} parent=1 // pred_check_branch
      %24 = sbr.rel (0) target = $region9
    $region8: #{planar_1d_forward.1} parent=1 // pred_region
      _
    $region9: #{planar_1d_forward.1} parent=1 // pred_fallthru
      _
    // Predicated region
    $region10: #{planar_1d_forward.1} parent=1 // pred_check
      _
    $region11: #{planar_1d_forward.1} parent=1 // pred_check_branch
      %26 = sbr.rel (0) target = $region13
    $region12: #{planar_1d_forward.1} parent=1 // pred_region
      %28 = vsyncadd [#allocation3], 0
      %s30 = sshll.u32 %s2, 4
      %s31 = int_to_ptr.hbm [resolvable:$true] %s30
      %s32 = sshll.u32 [#allocation6], 4
      %s33 = int_to_ptr.vmem [resolvable:$true] %s32
      %35 = dma.hbm_to_vmem [thread:$0]  %s31, 128, %s33, [#allocation3]
    $region13: #{planar_1d_forward.1} parent=1 // pred_fallthru
      _
    // Predicated region
    $region14: #{planar_1d_forward.1} parent=1 // pred_check
      _
    $region15: #{planar_1d_forward.1} parent=1 // pred_check_branch
      %37 = sbr.rel (0) target = $region17
    $region16: #{planar_1d_forward.1} parent=1 // pred_region
      %39 = dma.done [#allocation5], 16
    $region17: #{planar_1d_forward.1} parent=1 // pred_fallthru
      _
    // Predicated region
    $region18: #{planar_1d_forward.1} parent=1 // pred_check
      _
    $region19: #{planar_1d_forward.1} parent=1 // pred_check_branch
      %41 = sbr.rel (0) target = $region21
    $region20: #{planar_1d_forward.1} parent=1 // pred_region
      %43 = dma.done [#allocation3], 128
    $region21: #{planar_1d_forward.1} parent=1 // pred_fallthru
      _
    %44 = sfence
    %s45 = sld [smem:[#allocation2]]
    %s46 = sld [smem:[#allocation2 + $0x1]]
    %s47 = sld [smem:[#allocation2 + $0x2]]
    %s48 = smul.f32 %s45, %s46
    %v49 = vld [vmem:[#allocation6] sm:$0xff]
    %v50 = vld [vmem:[%s1] sm:$0xff]
    %v51 = vstv %s47
    %v52 = vmul.f32 %v51, %v50
    %54 = vset.pattern.permute.xlu0 0
    %55 = vperm.xlu0 %54, %v52
    %v56 = vpop.permute.xlu0 %55
    %v58 = vstv %s46
    %v59 = vmul.f32 %v58, %v49
    %v60 = vadd.f32 %v59, %v56
    %v61 = vtanh.pop %v60
    %v62 = vstv %s45
    %v63 = vmul.f32 %v62, %v61
    %v64 = vadd.f32 %v49, %v63
    %v65 = vmul.f32 %v58, %v64
    %v66 = vadd.f32 %v65, %v56
    %v67 = vtanh.pop %v66
    %v68 = vmul.f32 %v67, %v67
    %v69 = vsub.f32 1.0, %v68
    %v70 = vstv %s48
    %v71 = vmul.f32 %v70, %v69
    %v72 = vadd.f32 %v71, 1.0
    %v73 = vand.u32 2147483647, %v72
    %v74 = vlog2.pop %v73
    %v75 = vmul.f32 %v74, 0.6931472
    %76 = vst [vmem:[#allocation7] sm:$0xff] %v64
    %77 = vst [vmem:[#allocation8] sm:$0xff] %v75
    // Predicated region
    $region22: #{planar_1d_forward.1} parent=1 // pred_check
      _
    $region23: #{planar_1d_forward.1} parent=1 // pred_check_branch
      %79 = sbr.rel (0) target = $region25
    $region24: #{planar_1d_forward.1} parent=1 // pred_region
      %81 = vsyncadd [#allocation4], 0
      %s83 = sshll.u32 [#allocation7], 4
      %s84 = int_to_ptr.vmem [resolvable:$true] %s83
      %s85 = sshll.u32 %s3, 4
      %s86 = int_to_ptr.hbm [resolvable:$true] %s85
      %88 = dma.vmem_to_hbm [thread:$0]  %s84, 128, %s86, [#allocation4]
    $region25: #{planar_1d_forward.1} parent=1 // pred_fallthru
      _
    // Predicated region
    $region26: #{planar_1d_forward.1} parent=1 // pred_check
      _
    $region27: #{planar_1d_forward.1} parent=1 // pred_check_branch
      %90 = sbr.rel (0) target = $region29
    $region28: #{planar_1d_forward.1} parent=1 // pred_region
      %92 = vsyncadd [#allocation9], 0
      %s94 = sshll.u32 [#allocation8], 4
      %s95 = int_to_ptr.vmem [resolvable:$true] %s94
      %s96 = sshll.u32 %s4, 4
      %s97 = int_to_ptr.hbm [resolvable:$true] %s96
      %99 = dma.vmem_to_hbm [thread:$0]  %s95, 128, %s97, [#allocation9]
    $region29: #{planar_1d_forward.1} parent=1 // pred_fallthru
      _
    // Predicated region
    $region30: #{planar_1d_forward.1} parent=1 // pred_check
      _
    $region31: #{planar_1d_forward.1} parent=1 // pred_check_branch
      %101 = sbr.rel (0) target = $region33
    $region32: #{planar_1d_forward.1} parent=1 // pred_region
      %103 = dma.done [#allocation4], 128
    $region33: #{planar_1d_forward.1} parent=1 // pred_fallthru
      _
    // Predicated region
    $region34: #{planar_1d_forward.1} parent=1 // pred_check
      _
    $region35: #{planar_1d_forward.1} parent=1 // pred_check_branch
      %105 = sbr.rel (0) target = $region37
    $region36: #{planar_1d_forward.1} parent=1 // pred_region
      %107 = dma.done [#allocation9], 128
    $region37: #{planar_1d_forward.1} parent=1 // pred_fallthru
      _
    %108 = vsyncpa [#allocation3], 1
    %109 = vsyncpa [#allocation4], 1
    %110 = vsyncpa [#allocation9], 1
    %111 = vsyncpa [#allocation5], 1

</llo_original>
